<compile_context>
chip_gen: v5e
topology: v5e:2x2
jax: 0.10.0
libtpu: 0.0.40
codegen_flags: <defaults>
</compile_context>

<pallas_src>
import jax
import jax.numpy as jnp
from jax import lax
from jax.experimental import pallas as pl
from jax.experimental.pallas import tpu as pltpu


def _ceil_to(a: int, m: int) -> int:
    return ((a + m - 1) // m) * m


def _make_cosine_loss_kernel(inv_scale: float):
    def kernel(x_ref, out_ref, s_acc, ss_acc):
        i = pl.program_id(0)

        @pl.when(i == 0)
        def _init():
            s_acc[...] = jnp.zeros_like(s_acc)
            ss_acc[...] = jnp.zeros_like(ss_acc)

        x = x_ref[...].astype(jnp.float32)                    # (TM, D)
        sq = jnp.sum(x * x, axis=-1, keepdims=True)           # (TM, 1)
        # max(||x||, 1e-8) guard fused into a single EUP rsqrt:
        #   1/max(sqrt(sq), 1e-8) == rsqrt(max(sq, 1e-16))
        xn = x * lax.rsqrt(jnp.maximum(sq, 1e-16))            # (TM, D)

        # Accumulate the column sum of normalized rows and the exact trace.
        s_acc[...] = s_acc[...] + jnp.sum(xn, axis=0, keepdims=True)   # (1, D)
        ss_acc[...] = ss_acc[...] + jnp.sum(xn * xn)                   # (1, 1)

        @pl.when(i == pl.num_programs(0) - 1)
        def _finalize():
            s = s_acc[...]
            # sum over all i != j of cosine(i, j)  =  ||sum xn||^2 - trace
            total = jnp.sum(s * s) - jnp.sum(ss_acc[...])
            out_ref[0, 0] = total * inv_scale

    return kernel


def contrastive_loss(x: jax.Array, temperature: float, *, block_rows: int = 512) -> jax.Array:
    """x: (N, D). Returns a scalar float32 loss."""
    n, d = x.shape
    inv_scale = 1.0 / (float(temperature) * n)  # sum over j, then mean over i

    # Row-tile size: multiple of 8 sublanes, capped at block_rows.
    tm = min(block_rows, _ceil_to(n, 8))
    n_pad = _ceil_to(n, tm)
    if n_pad != n:
        # Zero rows normalize to the zero vector (eps-guarded), contributing
        # nothing to either accumulator, so zero-padding is exact.
        x = jnp.pad(x, ((0, n_pad - n), (0, 0)))

    out = pl.pallas_call(
        _make_cosine_loss_kernel(inv_scale),
        out_shape=jax.ShapeDtypeStruct((1, 1), jnp.float32),
        grid_spec=pltpu.PrefetchScalarGridSpec(
            num_scalar_prefetch=0,
            grid=(n_pad // tm,),
            in_specs=[pl.BlockSpec((tm, d), lambda i: (i, 0))],
            out_specs=pl.BlockSpec(memory_space=pltpu.MemorySpace.SMEM),
            scratch_shapes=[
                pltpu.VMEM((1, d), jnp.float32),   # running sum of normalized rows
                pltpu.VMEM((1, 1), jnp.float32),   # running trace (sum of xn^2)
            ],
        ),
        compiler_params=pltpu.CompilerParams(
            dimension_semantics=("arbitrary",),      # sequential accumulation axis
            vmem_limit_bytes=32 * 1024 * 1024,       # safe on v5e/v6e/v7x
        ),
    )(x)
    return out[0, 0]


def _reference(x, temperature):
    xf = x.astype(jnp.float32)
    norm = jnp.maximum(jnp.linalg.norm(xf, axis=-1, keepdims=True), 1e-8)
    xn = xf / norm
    sim = xn @ xn.T
    sim = sim - jnp.diag(jnp.diag(sim))
    return jnp.mean(jnp.sum(sim, axis=-1) / temperature)


if __name__ == "__main__":
    key = jax.random.PRNGKey(0)
    N, D = 8, 32
    temperature = 0.5
    x = jax.random.normal(key, (N, D), dtype=jnp.float32)

    loss = contrastive_loss(x, temperature)
    jax.block_until_ready(loss)

    ref = _reference(x, temperature)
    assert jnp.allclose(loss, ref, atol=1e-5, rtol=1e-4), (loss, ref)
    print("KERNEL_OK")
</pallas_src>

<mosaic_0001>
module attributes {stable_mosaic.version = 11 : i64} {
  func.func @kernel(%arg0: i32, %arg1: memref<8x32xf32, #tpu.memory_space<vmem>>, %arg2: memref<1x1xf32, #tpu.memory_space<smem>>, %arg3: memref<1x32xf32, #tpu.memory_space<vmem>>, %arg4: memref<1x1xf32, #tpu.memory_space<vmem>>) attributes {dimension_semantics = [#tpu.dimension_semantics<arbitrary>], iteration_bounds = array<i64: 1>, scalar_prefetch = 0 : i64, scratch_operands = 2 : i64, tpu.core_type = #tpu.core_type<tc>, window_params = [{transform_indices = @transform_0, window_bounds = array<i64: 8, 32>}, {transform_indices = @transform_1, window_bounds = array<i64: 1, 1>}]} {
    %c0_i32 = arith.constant 0 : i32
    %0 = arith.cmpi eq, %arg0, %c0_i32 : i32
    %1 = arith.extui %0 : i1 to i32
    %c0_i32_0 = arith.constant 0 : i32
    %2 = arith.cmpi ne, %1, %c0_i32_0 : i32
    scf.if %2 {
      %cst_15 = arith.constant 0.000000e+00 : f32
      %29 = vector.broadcast %cst_15 : f32 to vector<1x32xf32>
      %c0_16 = arith.constant 0 : index
      %c0_17 = arith.constant 0 : index
      %30 = vector.load %arg3[%c0_16, %c0_17] : memref<1x32xf32, #tpu.memory_space<vmem>>, vector<1x32xf32>
      tpu.vector_store %arg3[%c0_16, %c0_17], %29 {strides = array<i32>} : memref<1x32xf32, #tpu.memory_space<vmem>>, vector<1x32xf32>,
      %cst_18 = arith.constant 0.000000e+00 : f32
      %31 = vector.broadcast %cst_18 : f32 to vector<1x1xf32>
      %c0_19 = arith.constant 0 : index
      %c0_20 = arith.constant 0 : index
      %32 = vector.load %arg4[%c0_19, %c0_20] : memref<1x1xf32, #tpu.memory_space<vmem>>, vector<1x1xf32>
      tpu.vector_store %arg4[%c0_19, %c0_20], %31 {strides = array<i32>} : memref<1x1xf32, #tpu.memory_space<vmem>>, vector<1x1xf32>,
    } else {
    }
    %c0 = arith.constant 0 : index
    %c0_1 = arith.constant 0 : index
    %3 = vector.load %arg1[%c0, %c0_1] : memref<8x32xf32, #tpu.memory_space<vmem>>, vector<8x32xf32>
    %4 = arith.mulf %3, %3 : vector<8x32xf32>
    %cst = arith.constant dense<0.000000e+00> : vector<8xf32>
    %5 = vector.multi_reduction <add>, %4, %cst [1] : vector<8x32xf32> to vector<8xf32>
    %6 = vector.shape_cast %5 : vector<8xf32> to vector<8x1xf32>
    %cst_2 = arith.constant 1.000000e-16 : f32
    %7 = vector.broadcast %cst_2 : f32 to vector<8x1xf32>
    %8 = arith.maximumf %6, %7 : vector<8x1xf32>
    %9 = math.rsqrt %8 : vector<8x1xf32>
    %10 = vector.broadcast %9 : vector<8x1xf32> to vector<8x32xf32>
    %11 = arith.mulf %3, %10 : vector<8x32xf32>
    %c0_3 = arith.constant 0 : index
    %c0_4 = arith.constant 0 : index
    %12 = vector.load %arg3[%c0_3, %c0_4] : memref<1x32xf32, #tpu.memory_space<vmem>>, vector<1x32xf32>
    %cst_5 = arith.constant dense<0.000000e+00> : vector<32xf32>
    %13 = vector.multi_reduction <add>, %11, %cst_5 [0] : vector<8x32xf32> to vector<32xf32>
    %14 = vector.shape_cast %13 : vector<32xf32> to vector<1x32xf32>
    %15 = arith.addf %12, %14 : vector<1x32xf32>
    %c0_6 = arith.constant 0 : index
    %c0_7 = arith.constant 0 : index
    %16 = vector.load %arg3[%c0_6, %c0_7] : memref<1x32xf32, #tpu.memory_space<vmem>>, vector<1x32xf32>
    tpu.vector_store %arg3[%c0_6, %c0_7], %15 {strides = array<i32>} : memref<1x32xf32, #tpu.memory_space<vmem>>, vector<1x32xf32>,
    %c0_8 = arith.constant 0 : index
    %c0_9 = arith.constant 0 : index
    %17 = vector.load %arg4[%c0_8, %c0_9] : memref<1x1xf32, #tpu.memory_space<vmem>>, vector<1x1xf32>
    %18 = arith.mulf %11, %11 : vector<8x32xf32>
    %19 = vector.shape_cast %18 : vector<8x32xf32> to vector<1x8x32xf32>
    %cst_10 = arith.constant dense<0.000000e+00> : vector<1xf32>
    %20 = vector.multi_reduction <add>, %19, %cst_10 [1, 2] : vector<1x8x32xf32> to vector<1xf32>
    %21 = vector.shape_cast %20 : vector<1xf32> to vector<1x1x1xf32>
    %22 = vector.extract %21[0, 0, 0] : f32 from vector<1x1x1xf32>
    %23 = vector.broadcast %22 : f32 to vector<1x1xf32>
    %24 = arith.addf %17, %23 : vector<1x1xf32>
    %c0_11 = arith.constant 0 : index
    %c0_12 = arith.constant 0 : index
    %25 = vector.load %arg4[%c0_11, %c0_12] : memref<1x1xf32, #tpu.memory_space<vmem>>, vector<1x1xf32>
    tpu.vector_store %arg4[%c0_11, %c0_12], %24 {strides = array<i32>} : memref<1x1xf32, #tpu.memory_space<vmem>>, vector<1x1xf32>,
    %c0_i32_13 = arith.constant 0 : i32
    %26 = arith.cmpi eq, %arg0, %c0_i32_13 : i32
    %27 = arith.extui %26 : i1 to i32
    %c0_i32_14 = arith.constant 0 : i32
    %28 = arith.cmpi ne, %27, %c0_i32_14 : i32
    scf.if %28 {
      %c0_15 = arith.constant 0 : index
      %c0_16 = arith.constant 0 : index
      %29 = vector.load %arg3[%c0_15, %c0_16] : memref<1x32xf32, #tpu.memory_space<vmem>>, vector<1x32xf32>
      %30 = arith.mulf %29, %29 : vector<1x32xf32>
      %31 = vector.shape_cast %30 : vector<1x32xf32> to vector<1x1x32xf32>
      %cst_17 = arith.constant dense<0.000000e+00> : vector<1xf32>
      %32 = vector.multi_reduction <add>, %31, %cst_17 [1, 2] : vector<1x1x32xf32> to vector<1xf32>
      %33 = vector.shape_cast %32 : vector<1xf32> to vector<1x1x1xf32>
      %34 = vector.extract %33[0, 0, 0] : f32 from vector<1x1x1xf32>
      %c0_18 = arith.constant 0 : index
      %c0_19 = arith.constant 0 : index
      %35 = vector.load %arg4[%c0_18, %c0_19] : memref<1x1xf32, #tpu.memory_space<vmem>>, vector<1x1xf32>
      %36 = vector.shape_cast %35 : vector<1x1xf32> to vector<1x1x1xf32>
      %cst_20 = arith.constant dense<0.000000e+00> : vector<1xf32>
      %37 = vector.multi_reduction <add>, %36, %cst_20 [1, 2] : vector<1x1x1xf32> to vector<1xf32>
      %38 = vector.shape_cast %37 : vector<1xf32> to vector<1x1x1xf32>
      %39 = vector.extract %38[0, 0, 0] : f32 from vector<1x1x1xf32>
      %40 = arith.subf %34, %39 : f32
      %cst_21 = arith.constant 2.500000e-01 : f32
      %41 = arith.mulf %40, %cst_21 : f32
      %c0_22 = arith.constant 0 : index
      %c0_23 = arith.constant 0 : index
      %42 = memref.load %arg2[%c0_22, %c0_23] : memref<1x1xf32, #tpu.memory_space<smem>>
      memref.store %41, %arg2[%c0_22, %c0_23] : memref<1x1xf32, #tpu.memory_space<smem>>
    } else {
    }
    return
  }
  func.func @transform_0(%arg0: i32) -> (i32, i32) {
    %c0_i32 = arith.constant 0 : i32
    %c0_i32_0 = arith.constant 0 : i32
    return %arg0, %c0_i32 : i32, i32
  }
  func.func @transform_1(%arg0: i32) -> (i32, i32) {
    %c0_i32 = arith.constant 0 : i32
    %c0_i32_0 = arith.constant 0 : i32
    %c0_i32_1 = arith.constant 0 : i32
    return %c0_i32, %c0_i32_0 : i32, i32
  }
}

</mosaic_0001>

<llo_original>
// kernel: tpu_custom_call.1
$region0: #{tpu_custom_call.1}
  #allocation0 [shape = 'u32[]', space=smem, size = 0x4, offset = 0x4, fixed_abs, tag = 'smem constant byte address 0x4 - core index']
  #allocation1 [shape = 'u32[72,128]{1,0:T(1,128)}', space=vmem, size = 0x9000, scoped, tag = 'internal scratch']
  #allocation2 [shape = 'f32[1,32]{1,0:T(1,128)}', space=vmem, size = 0x200, scoped, tag = 'scratch operand']
  #allocation3 [shape = 'f32[1,1]{1,0:T(1,128)}', space=vmem, size = 0x200, scoped, tag = 'scratch operand']
  %s0 = inlined_call_operand.hbm [shape: f32[8,32], index: 0, kind: input, shape index: {}]
  %s1 = inlined_call_operand.hbm [shape: f32[1,1], index: 1, kind: output, shape index: {}]
  %s2 = sld [smem:[#allocation0]]
  $region26: #{tpu_custom_call.1} parent=0
    _
  %s4 = ssub.s32 1, %s2
  %s5 = scalar_select 0, %s4, %s2
  $region1: #{tpu_custom_call.1} parent=0
    #allocation4 [shape = 'u8[4096]{0}', space=vmem, size = 0x1000, scoped, tag = 'input window, operand 0, single buffered']
    #allocation5 [shape = 's32[1]{0}', space=sflag, size = 0x4, scoped, tag = 'scoped memory for tpu_custom_call.1']
    #allocation6 [shape = 's32[1]{0}', space=sflag, size = 0x4, scoped, tag = 'scoped memory for tpu_custom_call.1']
    #allocation7 [shape = 'u8[512]{0}', space=smem, size = 0x200, scoped, tag = 'output window, operand 0, single buffered']
    %6 = vsyncpa [#allocation5], 0
    %7 = vsyncpa [#allocation6], 0
    // Predicated region
    $region2: #{tpu_custom_call.1} parent=1 // pred_check
      _
    $region3: #{tpu_custom_call.1} parent=1 // pred_check_branch
      %9 = sbr.rel (0) target = $region5
    $region4: #{tpu_custom_call.1} parent=1 // pred_region
      %11 = vsyncadd [#allocation5], 0
      %s13 = sshll.u32 %s0, 4
      %s14 = int_to_ptr.hbm [resolvable:$true] %s13
      %s15 = sshll.u32 [#allocation4], 4
      %s16 = int_to_ptr.vmem [resolvable:$true] %s15
      %18 = dma.hbm_to_vmem [thread:$0]  %s14, 128, %s16, [#allocation5]
    $region5: #{tpu_custom_call.1} parent=1 // pred_fallthru
      _
    // Predicated region
    $region6: #{tpu_custom_call.1} parent=1 // pred_check
      _
    $region7: #{tpu_custom_call.1} parent=1 // pred_check_branch
      %20 = sbr.rel (0) target = $region9
    $region8: #{tpu_custom_call.1} parent=1 // pred_region
      %22 = dma.done [#allocation5], 128
    $region9: #{tpu_custom_call.1} parent=1 // pred_fallthru
      _
    %p23 = scmp.eq.s32.totalorder 0, 0
    // Predicated region
    $region10: #{tpu_custom_call.1} parent=1 // pred_check
      %p24 = pneg %p23
    $region11: #{tpu_custom_call.1} parent=1 // pred_check_branch
      %26 = sbr.rel (%p24) target = $region13
    $region12: #{tpu_custom_call.1} parent=1 // pred_region
      %vm27 = vcmask 253952
      %28 = vst.msk [vmem:[#allocation2] sm:$0x1] %vm27, 0.0
      %vm29 = vcmask 0
      %30 = vst.msk [vmem:[#allocation3] sm:$0x1] %vm29, 0.0
    $region13: #{tpu_custom_call.1} parent=1 // pred_fallthru
      _
    %v31 = vld [vmem:[#allocation4] sm:$0xff]
    %v32 = vmul.f32 %v31, %v31
    %vm33 = vcmask 261120
    %v34 = vsel %vm33, %v32, 0.0
    %35 = vadd.xlane.f32.xlu0 %v34
    %v36 = vpop.xlane.xlu0 %35
    %v37 = vmax.f32 %v36, 1e-16
    %v38 = vrsqrt.pop %v37
    %v39 = vmul.f32 %v38, %v37
    %v40 = vmul.f32 %v39, %v38
    %v41 = vmul.f32 0.5, %v40
    %v42 = vsub.f32 1.5, %v41
    %v43 = vmul.f32 %v38, %v42
    %vm44 = vweird.f32 %v37
    %vm45 = vweird.f32 %v38
    %vm46 = vmor %vm44, %vm45
    %v47 = vsel %vm46, %v38, %v43
    %v48 = vmul.f32 %v31, %v47
    %v49 = vld [vmem:[#allocation2] sm:$0x1]
    %v50 = vsel %vm33, %v48, 0.0
    %v51 = vrot.slane %v50, 4
    %v52 = vadd.f32 %v50, %v51
    %v53 = vrot.slane %v52, 2
    %v54 = vadd.f32 %v52, %v53
    %v55 = vrot.slane %v54, 1
    %v56 = vadd.f32 %v54, %v55
    %v57 = vadd.f32 %v49, %v56
    %vm58 = vcmask 253952
    %59 = vst.msk [vmem:[#allocation2] sm:$0x1] %vm58, %v57
    %v60 = vld [vmem:[#allocation3] sm:$0x1]
    %v61 = vmul.f32 %v48, %v48
    %v62 = vsel %vm33, %v61, 0.0
    %63 = vadd.xlane.f32.xlu0 %v62
    %v64 = vpop.xlane.xlu0 %63
    %v65 = vrot.slane %v64, 4
    %v66 = vadd.f32 %v64, %v65
    %v67 = vrot.slane %v66, 2
    %v68 = vadd.f32 %v66, %v67
    %v69 = vrot.slane %v68, 1
    %v70 = vadd.f32 %v68, %v69
    %s71 = vtos %v70
    %v72 = vstv %s71
    %v73 = vadd.f32 %v60, %v72
    %vm74 = vcmask 0
    %75 = vst.msk [vmem:[#allocation3] sm:$0x1] %vm74, %v73
    // Predicated region
    $region14: #{tpu_custom_call.1} parent=1 // pred_check
      %p76 = pneg %p23
    $region15: #{tpu_custom_call.1} parent=1 // pred_check_branch
      %78 = sbr.rel (%p76) target = $region17
    $region16: #{tpu_custom_call.1} parent=1 // pred_region
      %v79 = vld [vmem:[#allocation2] sm:$0x1]
      %v80 = vmul.f32 %v79, %v79
      %v81 = vsel %vm58, %v80, 0.0
      %82 = vadd.xlane.f32.xlu0 %v81
      %v83 = vpop.xlane.xlu0 %82
      %v84 = vrot.slane %v83, 4
      %v85 = vadd.f32 %v83, %v84
      %v86 = vrot.slane %v85, 2
      %v87 = vadd.f32 %v85, %v86
      %v88 = vrot.slane %v87, 1
      %v89 = vadd.f32 %v87, %v88
      %s90 = vtos %v89
      %v91 = vld [vmem:[#allocation3] sm:$0x1]
      %v92 = vadd.f32 %v91, 0.0
      %s93 = vtos %v92
      %s94 = ssub.f32 %s90, %s93
      %s95 = smul.f32 %s94, 0.25
      %s96 = scalar_lea.smem [#allocation7], 0
      %97 = sst [smem:[%s96]] %s95
    $region17: #{tpu_custom_call.1} parent=1 // pred_fallthru
      _
    // Predicated region
    $region18: #{tpu_custom_call.1} parent=1 // pred_check
      _
    $region19: #{tpu_custom_call.1} parent=1 // pred_check_branch
      %99 = sbr.rel (0) target = $region21
    $region20: #{tpu_custom_call.1} parent=1 // pred_region
      %101 = vsyncadd [#allocation6], 0
      %s103 = sshll.u32 %s1, 4
      %s104 = int_to_ptr.hbm [resolvable:$true] %s103
      %106 = dma.smem_to_hbm [#allocation7], 16, %s104, [#allocation6]
    $region21: #{tpu_custom_call.1} parent=1 // pred_fallthru
      _
    // Predicated region
    $region22: #{tpu_custom_call.1} parent=1 // pred_check
      _
    $region23: #{tpu_custom_call.1} parent=1 // pred_check_branch
      %108 = sbr.rel (0) target = $region25
    $region24: #{tpu_custom_call.1} parent=1 // pred_region
      %110 = dma.done [#allocation6], 16
    $region25: #{tpu_custom_call.1} parent=1 // pred_fallthru
      _
    %111 = sfence
    %112 = vsyncpa [#allocation5], 1
    %113 = vsyncpa [#allocation6], 1

</llo_original>
